<compile_context>
chip_gen: v5e
topology: v5e:2x2
jax: 0.10.0
libtpu: 0.0.40
codegen_flags: <defaults>
</compile_context>

<pallas_src>
import math

import jax
import jax.numpy as jnp
from jax.experimental import pallas as pl
from jax.experimental.pallas import tpu as pltpu


HIDDEN = 128  # matches self.hidden_dims in the PyTorch module


def _round_up(x: int, m: int) -> int:
    return ((x + m - 1) // m) * m


def _pick_tile_n(n: int, row_bytes: int, *, max_tile: int = 512,
                 vmem_budget: int = 12 * 1024 * 1024) -> int:
    """Row-tile choice.

    Big tiles amortize the ~0.35us/step pipeline overhead and keep the
    128-wide contraction feeding the MXU.  The budget keeps the 2x
    (double-buffered) row-tiled operands comfortably inside the default
    scoped-VMEM limit on all of v5e/v6e/v7x.  Keeping >= 2 grid steps lets
    Mosaic shard the 'parallel' row axis across v7x's two TensorCores.
    """
    rows_budget = max(8, vmem_budget // max(2 * row_bytes, 1))
    tile = min(max_tile, rows_budget)
    half = -(-max(n, 1) // 2)
    tile = min(tile, max(_round_up(half, 8), 8))
    return int(max(8, (tile // 8) * 8))


# ---------------------------------------------------------------------------
# Kernel 1 (training path): multi-view encoder (per-view Linear -> ReLU,
# masked mean fusion) fused with the fc layer.
# NOTE: the original MultiviewEncoder definition is not provided with the
# module; this is a deterministic synthetic per-view linear encoder producing
# H_common with the documented hidden_dims=128.
# TODO(synk): replace with the real MultiviewEncoder (incl. optional GCN
# path over S) once its definition is available.
# ---------------------------------------------------------------------------
def _make_encoder_fc_kernel(num_views: int):
    def kernel(*refs):
        xs = refs[0:num_views]
        ws = refs[num_views:2 * num_views]
        bs = refs[2 * num_views:3 * num_views]
        m_ref, fcw_ref, fcb_ref = refs[3 * num_views:3 * num_views + 3]
        h_out, y_out = refs[3 * num_views + 3:3 * num_views + 5]

        acc = None
        cnt = None
        for v in range(num_views):
            hv = jnp.dot(xs[v][...], ws[v][...],
                         preferred_element_type=jnp.float32) + bs[v][...]
            hv = jnp.maximum(hv, 0.0)                     # ReLU
            mv = m_ref[:, v:v + 1]                        # (TN, 1) f32 mask
            contrib = hv * mv
            acc = contrib if acc is None else acc + contrib
            cnt = mv if cnt is None else cnt + mv
        # Masked mean fusion (exact division; negligible vs. the MXU work).
        h = acc / jnp.maximum(cnt, 1.0)
        h_out[...] = h.astype(h_out.dtype)
        # Fused fc: Y_tilde = H_common @ W_fc + b_fc.  The K=128 contraction
        # rides the same MXU pipeline; avoids an HBM round trip of H.
        y_out[...] = (jnp.dot(h, fcw_ref[...],
                              preferred_element_type=jnp.float32)
                      + fcb_ref[...]).astype(y_out.dtype)

    return kernel


def encoder_fc_forward(xs, ws, bs, mask_f, fc_w, fc_b, *, tile_n: int):
    num_views = len(xs)
    n = xs[0].shape[0]
    k = fc_w.shape[1]
    grid = (n // tile_n,)

    in_specs = []
    for x in xs:                                   # per-view X tiles
        d = int(x.shape[1])
        in_specs.append(pl.BlockSpec((tile_n, d), lambda i: (i, 0)))
    for w in ws:                                   # resident weights
        d = int(w.shape[0])
        in_specs.append(pl.BlockSpec((d, HIDDEN), lambda i: (0, 0)))
    for _ in bs:                                   # resident biases
        in_specs.append(pl.BlockSpec((1, HIDDEN), lambda i: (0, 0)))
    in_specs.append(pl.BlockSpec((tile_n, num_views), lambda i: (i, 0)))
    in_specs.append(pl.BlockSpec((HIDDEN, k), lambda i: (0, 0)))
    in_specs.append(pl.BlockSpec((1, k), lambda i: (0, 0)))

    out_specs = (
        pl.BlockSpec((tile_n, HIDDEN), lambda i: (i, 0)),
        pl.BlockSpec((tile_n, k), lambda i: (i, 0)),
    )
    out_shape = (
        jax.ShapeDtypeStruct((n, HIDDEN), jnp.float32),
        jax.ShapeDtypeStruct((n, k), jnp.float32),
    )
    return pl.pallas_call(
        _make_encoder_fc_kernel(num_views),
        out_shape=out_shape,
        grid=grid,
        in_specs=in_specs,
        out_specs=out_specs,
        compiler_params=pltpu.CompilerParams(
            dimension_semantics=("parallel",)),
    )(*xs, *ws, *bs, mask_f, fc_w, fc_b)


# ---------------------------------------------------------------------------
# Kernel 2 (training path): Y = Y_tilde @ orth, Q = Student-t soft assignment.
# RHS = [orth | orth @ C^T] so a single MXU pass yields Y and the Y@C^T
# cross term; c_sq = sum(C*C, -1) is hoisted to the host (no per-step XLU
# transpose / recompute).
# TODO(synk): get_q_cluster is not defined in the provided source; the
# standard DEC Student-t (alpha=1) soft assignment is implemented here.
# ---------------------------------------------------------------------------
def _y_q_kernel(yt_ref, rhs_ref, csq_ref, y_ref, q_ref):
    k = y_ref.shape[-1]
    yx = jnp.dot(yt_ref[...], rhs_ref[...], preferred_element_type=jnp.float32)
    y = yx[:, :k]
    cross = yx[:, k:]
    y_ref[...] = y.astype(y_ref.dtype)

    y_sq = jnp.sum(y * y, axis=-1, keepdims=True)                # (TN, 1)
    dist = jnp.maximum(y_sq + csq_ref[...] - 2.0 * cross, 0.0)   # clamp fp cancel
    q = 1.0 / (1.0 + dist)
    q = q / jnp.sum(q, axis=-1, keepdims=True)
    q_ref[...] = q.astype(q_ref.dtype)


def y_q_forward(y_tilde, rhs, c_sq, *, tile_n: int):
    n, k = y_tilde.shape
    return pl.pallas_call(
        _y_q_kernel,
        out_shape=(
            jax.ShapeDtypeStruct((n, k), jnp.float32),
            jax.ShapeDtypeStruct((n, k), jnp.float32),
        ),
        grid=(n // tile_n,),
        in_specs=[
            pl.BlockSpec((tile_n, k), lambda i: (i, 0)),
            pl.BlockSpec((k, 2 * k), lambda i: (0, 0)),
            pl.BlockSpec((1, k), lambda i: (0, 0)),
        ],
        out_specs=(
            pl.BlockSpec((tile_n, k), lambda i: (i, 0)),
            pl.BlockSpec((tile_n, k), lambda i: (i, 0)),
        ),
        compiler_params=pltpu.CompilerParams(
            dimension_semantics=("parallel",)),
    )(y_tilde, rhs, c_sq)


# ---------------------------------------------------------------------------
# Kernel 3 (inference path): encoder + fc + Y + Q in ONE launch.
# W_eff = fc_w @ [orth | orth@C^T], b_eff = fc_b @ [orth | orth@C^T] are
# folded host-side; Y_tilde stays in vregs.
# ---------------------------------------------------------------------------
def _make_fused_inference_kernel(num_views: int):
    def kernel(*refs):
        xs = refs[0:num_views]
        ws = refs[num_views:2 * num_views]
        bs = refs[2 * num_views:3 * num_views]
        m_ref, weff_ref, beff_ref, csq_ref = refs[3 * num_views:
                                                  3 * num_views + 4]
        y_ref, h_ref, q_ref = refs[3 * num_views + 4:3 * num_views + 7]

        k = y_ref.shape[-1]
        acc = None
        cnt = None
        for v in range(num_views):
            hv = jnp.dot(xs[v][...], ws[v][...],
                         preferred_element_type=jnp.float32) + bs[v][...]
            hv = jnp.maximum(hv, 0.0)
            mv = m_ref[:, v:v + 1]
            contrib = hv * mv
            acc = contrib if acc is None else acc + contrib
            cnt = mv if cnt is None else cnt + mv
        h = acc / jnp.maximum(cnt, 1.0)
        h_ref[...] = h.astype(h_ref.dtype)

        yx = (jnp.dot(h, weff_ref[...], preferred_element_type=jnp.float32)
              + beff_ref[...])                               # (TN, 2K)
        y = yx[:, :k]
        cross = yx[:, k:]
        y_ref[...] = y.astype(y_ref.dtype)

        y_sq = jnp.sum(y * y, axis=-1, keepdims=True)
        dist = jnp.maximum(y_sq + csq_ref[...] - 2.0 * cross, 0.0)
        q = 1.0 / (1.0 + dist)
        q = q / jnp.sum(q, axis=-1, keepdims=True)
        q_ref[...] = q.astype(q_ref.dtype)

    return kernel


def fused_inference_forward(xs, ws, bs, mask_f, w_eff, b_eff, c_sq,
                            *, tile_n: int):
    num_views = len(xs)
    n = xs[0].shape[0]
    k = c_sq.shape[1]

    in_specs = []
    for x in xs:
        d = int(x.shape[1])
        in_specs.append(pl.BlockSpec((tile_n, d), lambda i: (i, 0)))
    for w in ws:
        d = int(w.shape[0])
        in_specs.append(pl.BlockSpec((d, HIDDEN), lambda i: (0, 0)))
    for _ in bs:
        in_specs.append(pl.BlockSpec((1, HIDDEN), lambda i: (0, 0)))
    in_specs.append(pl.BlockSpec((tile_n, num_views), lambda i: (i, 0)))
    in_specs.append(pl.BlockSpec((HIDDEN, 2 * k), lambda i: (0, 0)))
    in_specs.append(pl.BlockSpec((1, 2 * k), lambda i: (0, 0)))
    in_specs.append(pl.BlockSpec((1, k), lambda i: (0, 0)))

    out_specs = (
        pl.BlockSpec((tile_n, k), lambda i: (i, 0)),        # Y
        pl.BlockSpec((tile_n, HIDDEN), lambda i: (i, 0)),   # H_common
        pl.BlockSpec((tile_n, k), lambda i: (i, 0)),        # Q
    )
    out_shape = (
        jax.ShapeDtypeStruct((n, k), jnp.float32),
        jax.ShapeDtypeStruct((n, HIDDEN), jnp.float32),
        jax.ShapeDtypeStruct((n, k), jnp.float32),
    )
    return pl.pallas_call(
        _make_fused_inference_kernel(num_views),
        out_shape=out_shape,
        grid=(n // tile_n,),
        in_specs=in_specs,
        out_specs=out_specs,
        compiler_params=pltpu.CompilerParams(
            dimension_semantics=("parallel",)),
    )(*xs, *ws, *bs, mask_p := mask_f, w_eff, b_eff, c_sq)


# ---------------------------------------------------------------------------
# Model wrapper
# ---------------------------------------------------------------------------
class SpectralNetModelPallas:
    HIDDEN = HIDDEN

    def __init__(self, architecture, input_dim, cluster_num, use_gcn, key):
        assert cluster_num == architecture[-1]
        self.architecture = architecture
        self.cluster_num = cluster_num
        self.input_dim = list(input_dim)
        self.view_num = len(input_dim)
        self.use_gcn = use_gcn  # TODO(synk): GCN branch of the encoder not specified; unused.

        keys = jax.random.split(key, 2 * self.view_num + 3)
        self.enc_w, self.enc_b = [], []
        for v, d in enumerate(self.input_dim):
            scale = 1.0 / math.sqrt(d)
            w = jax.random.uniform(keys[2 * v], (d, self.HIDDEN),
                                   jnp.float32, -scale, scale)
            b = jax.random.uniform(keys[2 * v + 1], (1, self.HIDDEN),
                                   jnp.float32, -scale, scale)
            self.enc_w.append(w)
            self.enc_b.append(b)

        scale = 1.0 / math.sqrt(self.HIDDEN)
        self.fc_w = jax.random.uniform(keys[-3], (self.HIDDEN, cluster_num),
                                       jnp.float32, -scale, scale)
        self.fc_b = jax.random.uniform(keys[-2], (1, cluster_num),
                                       jnp.float32, -scale, scale)
        # nn.init.normal_ on centers
        self.centers = jax.random.normal(keys[-1], (cluster_num, cluster_num),
                                         jnp.float32)
        self.orthonorm_weights = jnp.eye(cluster_num, dtype=jnp.float32)

    @staticmethod
    def _make_orthonorm_weights(y_tilde):
        m = y_tilde.shape[0]
        # QR / matrix inverse have no Pallas equivalent; computed in plain JAX.
        _, r = jnp.linalg.qr(y_tilde)
        return math.sqrt(float(m)) * jnp.linalg.inv(r)

    @staticmethod
    def _pad_rows(arr, pad):
        if pad == 0:
            return arr
        return jnp.pad(arr, ((0, pad), (0, 0)))

    def _rhs_and_csq(self):
        # [orth | orth @ C^T] -> one MXU pass yields both Y and Y @ C^T.
        rhs = jnp.concatenate(
            [self.orthonorm_weights, self.orthonorm_weights @ self.centers.T],
            axis=1)                                             # (K, 2K)
        c_sq = jnp.sum(self.centers * self.centers, axis=-1)[None, :]  # (1, K)
        return rhs, c_sq

    def forward(self, X, M, S=None, should_update_orth_weights=True,
                tile_n=None, use_bf16_inputs=False):
        # Boolean row-gather X[v][M[:, v]] has a dynamic result shape; here
        # masking is applied as weights inside the fused encoder kernel
        # (identical to the gather path for an all-True mask).
        n = X[0].shape[0]
        k = self.cluster_num
        sum_d = sum(int(x.shape[1]) for x in X)
        x_itemsize = 2 if use_bf16_inputs else 4
        # bytes of row-tiled (double-buffered) operands per batch row:
        row_bytes = (sum_d * x_itemsize                    # per-view X tiles
                     + self.view_num * 4                   # mask
                     + (HIDDEN + 4 * k) * 4)               # H / Y / Q / Y_tilde
        if tile_n is None:
            tile_n = _pick_tile_n(n, row_bytes)
        tile_n = max(8, _round_up(int(tile_n), 8))
        n_padded = _round_up(n, tile_n)
        pad = n_padded - n

        xs = list(X)
        ws = list(self.enc_w)
        if use_bf16_inputs:
            # v6e/v7x: halves HBM bytes on the dominant input traffic; MXU
            # still accumulates in f32 (preferred_element_type).
            xs = [x.astype(jnp.bfloat16) for x in xs]
            ws = [w.astype(jnp.bfloat16) for w in ws]
        xs = [self._pad_rows(x, pad) for x in xs]
        mask_p = self._pad_rows(M.astype(jnp.float32), pad)

        if should_update_orth_weights:
            # ---- training path: 2 pallas_calls + plain-JAX QR glue ----
            h_p, yt_p = encoder_fc_forward(xs, ws, self.enc_b, mask_p,
                                           self.fc_w, self.fc_b,
                                           tile_n=tile_n)
            y_tilde = yt_p[:n]
            # NOTE: host-side mutation; hoist this out if jit-ing forward().
            self.orthonorm_weights = self._make_orthonorm_weights(y_tilde)
            rhs, c_sq = self._rhs_and_csq()
            y_p, q_p = y_q_forward(yt_p, rhs, c_sq, tile_n=tile_n)
            return y_p[:n], h_p[:n], q_p[:n]

        # ---- inference path: single fully fused pallas_call ----
        rhs, c_sq = self._rhs_and_csq()
        w_eff = self.fc_w @ rhs                                 # (128, 2K)
        b_eff = self.fc_b @ rhs                                 # (1, 2K)
        y_p, h_p, q_p = fused_inference_forward(
            xs, ws, self.enc_b, mask_p, w_eff, b_eff, c_sq, tile_n=tile_n)
        return y_p[:n], h_p[:n], q_p[:n]


# ---------------------------------------------------------------------------
if __name__ == "__main__":
    key = jax.random.PRNGKey(0)
    k_model, k_x1, k_x2 = jax.random.split(key, 3)

    N = 16                 # batch rows
    input_dim = [24, 32]   # two views with different feature dims
    cluster_num = 8
    architecture = [128, 64, cluster_num]

    model = SpectralNetModelPallas(architecture, input_dim, cluster_num,
                                   use_gcn=False, key=k_model)

    x1 = jax.random.normal(k_x1, (N, input_dim[0]), jnp.float32)
    x2 = jax.random.normal(k_x2, (N, input_dim[1]), jnp.float32)
    M = jnp.ones((N, len(input_dim)), dtype=jnp.bool_)

    # Training path: updates orthonorm weights (2 kernels + QR glue).
    Y, H_common, Q = model.forward([x1, x2], M,
                                   should_update_orth_weights=True)
    # Inference path: single fully fused kernel reusing the same weights.
    Y2, H2, Q2 = model.forward([x1, x2], M,
                               should_update_orth_weights=False)
    jax.block_until_ready((Y, H_common, Q, Y2, H2, Q2))

    # light sanity checks
    assert Y.shape == (N, cluster_num) and Y2.shape == (N, cluster_num)
    assert H_common.shape == (N, SpectralNetModelPallas.HIDDEN)
    assert H2.shape == (N, SpectralNetModelPallas.HIDDEN)
    assert Q.shape == (N, cluster_num) and Q2.shape == (N, cluster_num)
    assert bool(jnp.all(jnp.isfinite(Y))) and bool(jnp.all(jnp.isfinite(Q)))
    # exact divisions in the Student-t normalization -> tight tolerance
    assert jnp.allclose(jnp.sum(Q, axis=-1), 1.0, atol=1e-4)
    assert jnp.allclose(jnp.sum(Q2, axis=-1), 1.0, atol=1e-4)
    # training and fused-inference paths agree (same orthonorm weights;
    # difference is only fp reassociation from the host-side weight folding)
    assert jnp.allclose(Y, Y2, atol=2e-3, rtol=2e-3)
    assert jnp.allclose(H_common, H2, atol=1e-4, rtol=1e-4)

    print("KERNEL_OK")
</pallas_src>

<mosaic_0001>
module attributes {stable_mosaic.version = 11 : i64} {
  func.func @kernel(%arg0: i32, %arg1: memref<8x24xf32, #tpu.memory_space<vmem>>, %arg2: memref<8x32xf32, #tpu.memory_space<vmem>>, %arg3: memref<24x128xf32, #tpu.memory_space<vmem>>, %arg4: memref<32x128xf32, #tpu.memory_space<vmem>>, %arg5: memref<1x128xf32, #tpu.memory_space<vmem>>, %arg6: memref<1x128xf32, #tpu.memory_space<vmem>>, %arg7: memref<8x2xf32, #tpu.memory_space<vmem>>, %arg8: memref<128x8xf32, #tpu.memory_space<vmem>>, %arg9: memref<1x8xf32, #tpu.memory_space<vmem>>, %arg10: memref<8x128xf32, #tpu.memory_space<vmem>>, %arg11: memref<8x8xf32, #tpu.memory_space<vmem>>) attributes {dimension_semantics = [#tpu.dimension_semantics<parallel>], iteration_bounds = array<i64: 2>, scalar_prefetch = 0 : i64, scratch_operands = 0 : i64, tpu.core_type = #tpu.core_type<tc>, window_params = [{transform_indices = @transform_0, window_bounds = array<i64: 8, 24>}, {transform_indices = @transform_1, window_bounds = array<i64: 8, 32>}, {pipeline_mode = #tpu.pipeline_mode<synchronous>, transform_indices = @transform_2, window_bounds = array<i64: 24, 128>}, {pipeline_mode = #tpu.pipeline_mode<synchronous>, transform_indices = @transform_3, window_bounds = array<i64: 32, 128>}, {pipeline_mode = #tpu.pipeline_mode<synchronous>, transform_indices = @transform_4, window_bounds = array<i64: 1, 128>}, {pipeline_mode = #tpu.pipeline_mode<synchronous>, transform_indices = @transform_5, window_bounds = array<i64: 1, 128>}, {transform_indices = @transform_6, window_bounds = array<i64: 8, 2>}, {pipeline_mode = #tpu.pipeline_mode<synchronous>, transform_indices = @transform_7, window_bounds = array<i64: 128, 8>}, {pipeline_mode = #tpu.pipeline_mode<synchronous>, transform_indices = @transform_8, window_bounds = array<i64: 1, 8>}, {transform_indices = @transform_9, window_bounds = array<i64: 8, 128>}, {transform_indices = @transform_10, window_bounds = array<i64: 8, 8>}]} {
    %c0 = arith.constant 0 : index
    %c0_0 = arith.constant 0 : index
    %0 = vector.load %arg1[%c0, %c0_0] : memref<8x24xf32, #tpu.memory_space<vmem>>, vector<8x24xf32>
    %c0_1 = arith.constant 0 : index
    %c0_2 = arith.constant 0 : index
    %1 = vector.load %arg3[%c0_1, %c0_2] : memref<24x128xf32, #tpu.memory_space<vmem>>, vector<24x128xf32>
    %cst = arith.constant dense<0.000000e+00> : vector<8x128xf32>
    %2 = tpu.matmul %0, %1, %cst {dimension_numbers = #tpu.dot_dimension_numbers<[1], [0], [0], [1], [0, 0, 1, 1], [], []>} : vector<8x24xf32>, vector<24x128xf32>, vector<8x128xf32> -> vector<8x128xf32>
    %c0_3 = arith.constant 0 : index
    %c0_4 = arith.constant 0 : index
    %3 = vector.load %arg5[%c0_3, %c0_4] : memref<1x128xf32, #tpu.memory_space<vmem>>, vector<1x128xf32>
    %4 = vector.broadcast %3 : vector<1x128xf32> to vector<8x128xf32>
    %5 = arith.addf %2, %4 : vector<8x128xf32>
    %cst_5 = arith.constant 0.000000e+00 : f32
    %6 = vector.broadcast %cst_5 : f32 to vector<8x128xf32>
    %7 = arith.maximumf %5, %6 : vector<8x128xf32>
    %c0_6 = arith.constant 0 : index
    %c0_7 = arith.constant 0 : index
    %8 = vector.load %arg7[%c0_6, %c0_7] : memref<8x2xf32, #tpu.memory_space<vmem>>, vector<8x1xf32>
    %9 = vector.broadcast %8 : vector<8x1xf32> to vector<8x128xf32>
    %10 = arith.mulf %7, %9 : vector<8x128xf32>
    %c0_8 = arith.constant 0 : index
    %c0_9 = arith.constant 0 : index
    %11 = vector.load %arg2[%c0_8, %c0_9] : memref<8x32xf32, #tpu.memory_space<vmem>>, vector<8x32xf32>
    %c0_10 = arith.constant 0 : index
    %c0_11 = arith.constant 0 : index
    %12 = vector.load %arg4[%c0_10, %c0_11] : memref<32x128xf32, #tpu.memory_space<vmem>>, vector<32x128xf32>
    %cst_12 = arith.constant dense<0.000000e+00> : vector<8x128xf32>
    %13 = tpu.matmul %11, %12, %cst_12 {dimension_numbers = #tpu.dot_dimension_numbers<[1], [0], [0], [1], [0, 0, 1, 1], [], []>} : vector<8x32xf32>, vector<32x128xf32>, vector<8x128xf32> -> vector<8x128xf32>
    %c0_13 = arith.constant 0 : index
    %c0_14 = arith.constant 0 : index
    %14 = vector.load %arg6[%c0_13, %c0_14] : memref<1x128xf32, #tpu.memory_space<vmem>>, vector<1x128xf32>
    %15 = vector.broadcast %14 : vector<1x128xf32> to vector<8x128xf32>
    %16 = arith.addf %13, %15 : vector<8x128xf32>
    %cst_15 = arith.constant 0.000000e+00 : f32
    %17 = vector.broadcast %cst_15 : f32 to vector<8x128xf32>
    %18 = arith.maximumf %16, %17 : vector<8x128xf32>
    %c0_16 = arith.constant 0 : index
    %c1 = arith.constant 1 : index
    %19 = vector.load %arg7[%c0_16, %c1] : memref<8x2xf32, #tpu.memory_space<vmem>>, vector<8x1xf32>
    %20 = vector.broadcast %19 : vector<8x1xf32> to vector<8x128xf32>
    %21 = arith.mulf %18, %20 : vector<8x128xf32>
    %22 = arith.addf %10, %21 : vector<8x128xf32>
    %23 = arith.addf %8, %19 : vector<8x1xf32>
    %cst_17 = arith.constant 1.000000e+00 : f32
    %24 = vector.broadcast %cst_17 : f32 to vector<8x1xf32>
    %25 = arith.maximumf %23, %24 : vector<8x1xf32>
    %26 = vector.broadcast %25 : vector<8x1xf32> to vector<8x128xf32>
    %27 = arith.divf %22, %26 : vector<8x128xf32>
    %c0_18 = arith.constant 0 : index
    %c0_19 = arith.constant 0 : index
    %28 = vector.load %arg10[%c0_18, %c0_19] : memref<8x128xf32, #tpu.memory_space<vmem>>, vector<8x128xf32>
    tpu.vector_store %arg10[%c0_18, %c0_19], %27 {strides = array<i32>} : memref<8x128xf32, #tpu.memory_space<vmem>>, vector<8x128xf32>,
    %c0_20 = arith.constant 0 : index
    %c0_21 = arith.constant 0 : index
    %29 = vector.load %arg8[%c0_20, %c0_21] : memref<128x8xf32, #tpu.memory_space<vmem>>, vector<128x8xf32>
    %cst_22 = arith.constant dense<0.000000e+00> : vector<8x8xf32>
    %30 = tpu.matmul %27, %29, %cst_22 {dimension_numbers = #tpu.dot_dimension_numbers<[1], [0], [0], [1], [0, 0, 1, 1], [], []>} : vector<8x128xf32>, vector<128x8xf32>, vector<8x8xf32> -> vector<8x8xf32>
    %c0_23 = arith.constant 0 : index
    %c0_24 = arith.constant 0 : index
    %31 = vector.load %arg9[%c0_23, %c0_24] : memref<1x8xf32, #tpu.memory_space<vmem>>, vector<1x8xf32>
    %32 = vector.broadcast %31 : vector<1x8xf32> to vector<8x8xf32>
    %33 = arith.addf %30, %32 : vector<8x8xf32>
    %c0_25 = arith.constant 0 : index
    %c0_26 = arith.constant 0 : index
    %34 = vector.load %arg11[%c0_25, %c0_26] : memref<8x8xf32, #tpu.memory_space<vmem>>, vector<8x8xf32>
    tpu.vector_store %arg11[%c0_25, %c0_26], %33 {strides = array<i32>} : memref<8x8xf32, #tpu.memory_space<vmem>>, vector<8x8xf32>,
    return
  }
  func.func @transform_0(%arg0: i32) -> (i32, i32) {
    %c0_i32 = arith.constant 0 : i32
    %c0_i32_0 = arith.constant 0 : i32
    return %arg0, %c0_i32 : i32, i32
  }
  func.func @transform_1(%arg0: i32) -> (i32, i32) {
    %c0_i32 = arith.constant 0 : i32
    %c0_i32_0 = arith.constant 0 : i32
    return %arg0, %c0_i32 : i32, i32
  }
  func.func @transform_2(%arg0: i32) -> (i32, i32) {
    %c0_i32 = arith.constant 0 : i32
    %c0_i32_0 = arith.constant 0 : i32
    %c0_i32_1 = arith.constant 0 : i32
    return %c0_i32, %c0_i32_0 : i32, i32
  }
  func.func @transform_3(%arg0: i32) -> (i32, i32) {
    %c0_i32 = arith.constant 0 : i32
    %c0_i32_0 = arith.constant 0 : i32
    %c0_i32_1 = arith.constant 0 : i32
    return %c0_i32, %c0_i32_0 : i32, i32
  }
  func.func @transform_4(%arg0: i32) -> (i32, i32) {
    %c0_i32 = arith.constant 0 : i32
    %c0_i32_0 = arith.constant 0 : i32
    %c0_i32_1 = arith.constant 0 : i32
    return %c0_i32, %c0_i32_0 : i32, i32
  }
  func.func @transform_5(%arg0: i32) -> (i32, i32) {
    %c0_i32 = arith.constant 0 : i32
    %c0_i32_0 = arith.constant 0 : i32
    %c0_i32_1 = arith.constant 0 : i32
    return %c0_i32, %c0_i32_0 : i32, i32
  }
  func.func @transform_6(%arg0: i32) -> (i32, i32) {
    %c0_i32 = arith.constant 0 : i32
    %c0_i32_0 = arith.constant 0 : i32
    return %arg0, %c0_i32 : i32, i32
  }
  func.func @transform_7(%arg0: i32) -> (i32, i32) {
    %c0_i32 = arith.constant 0 : i32
    %c0_i32_0 = arith.constant 0 : i32
    %c0_i32_1 = arith.constant 0 : i32
    return %c0_i32, %c0_i32_0 : i32, i32
  }
  func.func @transform_8(%arg0: i32) -> (i32, i32) {
    %c0_i32 = arith.constant 0 : i32
    %c0_i32_0 = arith.constant 0 : i32
    %c0_i32_1 = arith.constant 0 : i32
    return %c0_i32, %c0_i32_0 : i32, i32
  }
  func.func @transform_9(%arg0: i32) -> (i32, i32) {
    %c0_i32 = arith.constant 0 : i32
    %c0_i32_0 = arith.constant 0 : i32
    return %arg0, %c0_i32 : i32, i32
  }
  func.func @transform_10(%arg0: i32) -> (i32, i32) {
    %c0_i32 = arith.constant 0 : i32
    %c0_i32_0 = arith.constant 0 : i32
    return %arg0, %c0_i32 : i32, i32
  }
}

</mosaic_0001>

<llo_original>
// kernel: tpu_custom_call.1
$region0: #{tpu_custom_call.1}
  #allocation0 [shape = 'u32[]', space=smem, size = 0x4, offset = 0x4, fixed_abs, tag = 'smem constant byte address 0x4 - core index']
  #allocation1 [shape = 'u32[72,128]{1,0:T(1,128)}', space=vmem, size = 0x9000, scoped, tag = 'internal scratch']
  %s0 = inlined_call_operand.vmem [shape: f32[16,24], index: 0, kind: input, shape index: {}]
  %s1 = inlined_call_operand.vmem [shape: f32[16,32], index: 1, kind: input, shape index: {}]
  %s2 = inlined_call_operand.vmem [shape: f32[24,128], index: 2, kind: input, shape index: {}]
  %s3 = inlined_call_operand.vmem [shape: f32[32,128], index: 3, kind: input, shape index: {}]
  %s4 = inlined_call_operand.vmem [shape: f32[1,128], index: 4, kind: input, shape index: {}]
  %s5 = inlined_call_operand.vmem [shape: f32[1,128], index: 5, kind: input, shape index: {}]
  %s6 = inlined_call_operand.vmem [shape: f32[16,2], index: 6, kind: input, shape index: {}]
  %s7 = inlined_call_operand.vmem [shape: f32[128,8], index: 7, kind: input, shape index: {}]
  %s8 = inlined_call_operand.vmem [shape: f32[1,8], index: 8, kind: input, shape index: {}]
  %s9 = inlined_call_operand.hbm [shape: f32[16,128], index: 9, kind: output, shape index: {0}]
  %s10 = inlined_call_operand.vmem [shape: f32[16,8], index: 10, kind: output, shape index: {1}]
  %11 = xla_tuple %s9, %s10
  %s12 = sld [smem:[#allocation0]]
  $region77: #{tpu_custom_call.1} parent=0
    _
  %s14 = ssub.s32 1, %s12
  %s15 = scalar_select 0, %s14, %s12
  $region1: #{tpu_custom_call.1} parent=0
    #allocation2 [shape = 'u8[8192]{0}', space=vmem, size = 0x2000, scoped, tag = 'output window, operand 0']
    #allocation3 [shape = 's32[2]{0}', space=sflag, size = 0x8, scoped, tag = 'scoped memory for tpu_custom_call.1']
    %16 = vsyncpa [#allocation3], 0
    %s17 = scalar_lea.sflag [#allocation3], 1
    %18 = vsyncpa %s17, 0
    loop: start=0, step=1, limit=4
    $region2: #{tpu_custom_call.1} parent=1 // loop_pre_header
      _
    $region3: #{tpu_custom_call.1} parent=1 // loop_header
      %s20 = sphi 0, %s24
      %p21 = scmp.ge.s32.totalorder %s20, 4
      %s30 = sphi 0, %s32
      %s33 = sphi 0, %s30
      %s34 = sphi 0, %s33
      %s50 = sphi 0, %s34
      %s56 = sphi 0, %s58
      %s59 = sphi 0, %s56
      %s60 = sphi 0, %s59
      %s76 = sphi 0, %s60
      %s80 = sphi 0, %s80
      %s82 = sphi 0, %s80
      %s83 = sphi 0, %s82
      %s97 = sphi 0, %s83
      %s101 = sphi 0, %s101
      %s103 = sphi 0, %s101
      %s104 = sphi 0, %s103
      %s118 = sphi 0, %s104
      %s122 = sphi 0, %s122
      %s124 = sphi 0, %s122
      %s125 = sphi 0, %s124
      %s139 = sphi 0, %s125
      %s143 = sphi 0, %s143
      %s145 = sphi 0, %s143
      %s146 = sphi 0, %s145
      %s160 = sphi 0, %s146
      %s166 = sphi 0, %s168
      %s169 = sphi 0, %s166
      %s170 = sphi 0, %s169
      %s186 = sphi 0, %s170
      %s190 = sphi 0, %s190
      %s192 = sphi 0, %s190
      %s193 = sphi 0, %s192
      %s207 = sphi 0, %s193
      %s211 = sphi 0, %s211
      %s213 = sphi 0, %s211
      %s214 = sphi 0, %s213
      %s228 = sphi 0, %s214
      %s234 = sphi 0, %s236
      %s237 = sphi 0, %s234
      %s238 = sphi 0, %s237
      %s254 = sphi 0, %s238
      %s260 = sphi 0, %s262
      %s263 = sphi 0, %s260
      %s264 = sphi 0, %s263
      %s280 = sphi 0, %s264
    $region4: #{tpu_custom_call.1} parent=1 // loop_header_branch
      %23 = sbr.rel (%p21) target = $region8
    $region5: #{tpu_custom_call.1} parent=1 // loop_body
      %s25 = ssub.s32 %s20, 1
      %s26 = ssub.s32 %s20, 2
      %s27 = sadd.s32 %s20, 1
      %s28 = ssub.s32 %s20, %s27
      %p29 = scmp.eq.s32.totalorder %s28, 0
      %s31 = sadd.s32 %s30, 1
      %s32 = scalar_select %p29, %s30, %s31
      %p35 = pneg %p29
      %p36 = scmp.eq.s32.totalorder %s20, 1
      %p37 = por %p35, %p36
      %p38 = scmp.ne.s32.totalorder %s30, %s33
      %p39 = scmp.eq.s32.totalorder %s20, 0
      %p40 = por %p38, %p39
      %p41 = scmp.ne.s32.totalorder %s30, %s33
      %p42 = scmp.eq.s32.totalorder %s25, 1
      %p43 = por %p41, %p42
      %p44 = scmp.ne.s32.totalorder %s33, %s34
      %p45 = scmp.eq.s32.totalorder %s25, 0
      %p46 = por %p44, %p45
      %p47 = scmp.ne.s32.totalorder %s33, %s34
      %p48 = scmp.eq.s32.totalorder %s26, 1
      %p49 = por %p47, %p48
      %p51 = scmp.ne.s32.totalorder %s34, %s50
      %p52 = scmp.eq.s32.totalorder %s26, 0
      %p53 = por %p51, %p52
      %s54 = ssub.s32 %s20, %s27
      %p55 = scmp.eq.s32.totalorder %s54, 0
      %s57 = sadd.s32 %s56, 1
      %s58 = scalar_select %p55, %s56, %s57
      %p61 = pneg %p55
      %p62 = scmp.eq.s32.totalorder %s20, 1
      %p63 = por %p61, %p62
      %p64 = scmp.ne.s32.totalorder %s56, %s59
      %p65 = scmp.eq.s32.totalorder %s20, 0
      %p66 = por %p64, %p65
      %p67 = scmp.ne.s32.totalorder %s56, %s59
      %p68 = scmp.eq.s32.totalorder %s25, 1
      %p69 = por %p67, %p68
      %p70 = scmp.ne.s32.totalorder %s59, %s60
      %p71 = scmp.eq.s32.totalorder %s25, 0
      %p72 = por %p70, %p71
      %p73 = scmp.ne.s32.totalorder %s59, %s60
      %p74 = scmp.eq.s32.totalorder %s26, 1
      %p75 = por %p73, %p74
      %p77 = scmp.ne.s32.totalorder %s60, %s76
      %p78 = scmp.eq.s32.totalorder %s26, 0
      %p79 = por %p77, %p78
      %s81 = sadd.s32 %s80, 1
      %p84 = scmp.eq.s32.totalorder %s20, 1
      %p85 = scmp.ne.s32.totalorder %s80, %s82
      %p86 = scmp.eq.s32.totalorder %s20, 0
      %p87 = por %p85, %p86
      %p88 = scmp.ne.s32.totalorder %s80, %s82
      %p89 = scmp.eq.s32.totalorder %s25, 1
      %p90 = por %p88, %p89
      %p91 = scmp.ne.s32.totalorder %s82, %s83
      %p92 = scmp.eq.s32.totalorder %s25, 0
      %p93 = por %p91, %p92
      %p94 = scmp.ne.s32.totalorder %s82, %s83
      %p95 = scmp.eq.s32.totalorder %s26, 1
      %p96 = por %p94, %p95
      %p98 = scmp.ne.s32.totalorder %s83, %s97
      %p99 = scmp.eq.s32.totalorder %s26, 0
      %p100 = por %p98, %p99
      %s102 = sadd.s32 %s101, 1
      %p105 = scmp.eq.s32.totalorder %s20, 1
      %p106 = scmp.ne.s32.totalorder %s101, %s103
      %p107 = scmp.eq.s32.totalorder %s20, 0
      %p108 = por %p106, %p107
      %p109 = scmp.ne.s32.totalorder %s101, %s103
      %p110 = scmp.eq.s32.totalorder %s25, 1
      %p111 = por %p109, %p110
      %p112 = scmp.ne.s32.totalorder %s103, %s104
      %p113 = scmp.eq.s32.totalorder %s25, 0
      %p114 = por %p112, %p113
      %p115 = scmp.ne.s32.totalorder %s103, %s104
      %p116 = scmp.eq.s32.totalorder %s26, 1
      %p117 = por %p115, %p116
      %p119 = scmp.ne.s32.totalorder %s104, %s118
      %p120 = scmp.eq.s32.totalorder %s26, 0
      %p121 = por %p119, %p120
      %s123 = sadd.s32 %s122, 1
      %p126 = scmp.eq.s32.totalorder %s20, 1
      %p127 = scmp.ne.s32.totalorder %s122, %s124
      %p128 = scmp.eq.s32.totalorder %s20, 0
      %p129 = por %p127, %p128
      %p130 = scmp.ne.s32.totalorder %s122, %s124
      %p131 = scmp.eq.s32.totalorder %s25, 1
      %p132 = por %p130, %p131
      %p133 = scmp.ne.s32.totalorder %s124, %s125
      %p134 = scmp.eq.s32.totalorder %s25, 0
      %p135 = por %p133, %p134
      %p136 = scmp.ne.s32.totalorder %s124, %s125
      %p137 = scmp.eq.s32.totalorder %s26, 1
      %p138 = por %p136, %p137
      %p140 = scmp.ne.s32.totalorder %s125, %s139
      %p141 = scmp.eq.s32.totalorder %s26, 0
      %p142 = por %p140, %p141
      %s144 = sadd.s32 %s143, 1
      %p147 = scmp.eq.s32.totalorder %s20, 1
      %p148 = scmp.ne.s32.totalorder %s143, %s145
      %p149 = scmp.eq.s32.totalorder %s20, 0
      %p150 = por %p148, %p149
      %p151 = scmp.ne.s32.totalorder %s143, %s145
      %p152 = scmp.eq.s32.totalorder %s25, 1
      %p153 = por %p151, %p152
      %p154 = scmp.ne.s32.totalorder %s145, %s146
      %p155 = scmp.eq.s32.totalorder %s25, 0
      %p156 = por %p154, %p155
      %p157 = scmp.ne.s32.totalorder %s145, %s146
      %p158 = scmp.eq.s32.totalorder %s26, 1
      %p159 = por %p157, %p158
      %p161 = scmp.ne.s32.totalorder %s146, %s160
      %p162 = scmp.eq.s32.totalorder %s26, 0
      %p163 = por %p161, %p162
      %s164 = ssub.s32 %s20, %s27
      %p165 = scmp.eq.s32.totalorder %s164, 0
      %s167 = sadd.s32 %s166, 1
      %s168 = scalar_select %p165, %s166, %s167
      %p171 = pneg %p165
      %p172 = scmp.eq.s32.totalorder %s20, 1
      %p173 = por %p171, %p172
      %p174 = scmp.ne.s32.totalorder %s166, %s169
      %p175 = scmp.eq.s32.totalorder %s20, 0
      %p176 = por %p174, %p175
      %p177 = scmp.ne.s32.totalorder %s166, %s169
      %p178 = scmp.eq.s32.totalorder %s25, 1
      %p179 = por %p177, %p178
      %p180 = scmp.ne.s32.totalorder %s169, %s170
      %p181 = scmp.eq.s32.totalorder %s25, 0
      %p182 = por %p180, %p181
      %p183 = scmp.ne.s32.totalorder %s169, %s170
      %p184 = scmp.eq.s32.totalorder %s26, 1
      %p185 = por %p183, %p184
      %p187 = scmp.ne.s32.totalorder %s170, %s186
      %p188 = scmp.eq.s32.totalorder %s26, 0
      %p189 = por %p187, %p188
      %s191 = sadd.s32 %s190, 1
      %p194 = scmp.eq.s32.totalorder %s20, 1
      %p195 = scmp.ne.s32.totalorder %s190, %s192
      %p196 = scmp.eq.s32.totalorder %s20, 0
      %p197 = por %p195, %p196
      %p198 = scmp.ne.s32.totalorder %s190, %s192
      %p199 = scmp.eq.s32.totalorder %s25, 1
      %p200 = por %p198, %p199
      %p201 = scmp.ne.s32.totalorder %s192, %s193
      %p202 = scmp.eq.s32.totalorder %s25, 0
      %p203 = por %p201, %p202
      %p204 = scmp.ne.s32.totalorder %s192, %s193
      %p205 = scmp.eq.s32.totalorder %s26, 1
      %p206 = por %p204, %p205
      %p208 = scmp.ne.s32.totalorder %s193, %s207
      %p209 = scmp.eq.s32.totalorder %s26, 0
      %p210 = por %p208, %p209
      %s212 = sadd.s32 %s211, 1
      %p215 = scmp.eq.s32.totalorder %s20, 1
      %p216 = scmp.ne.s32.totalorder %s211, %s213
      %p217 = scmp.eq.s32.totalorder %s20, 0
      %p218 = por %p216, %p217
      %p219 = scmp.ne.s32.totalorder %s211, %s213
      %p220 = scmp.eq.s32.totalorder %s25, 1
      %p221 = por %p219, %p220
      %p222 = scmp.ne.s32.totalorder %s213, %s214
      %p223 = scmp.eq.s32.totalorder %s25, 0
      %p224 = por %p222, %p223
      %p225 = scmp.ne.s32.totalorder %s213, %s214
      %p226 = scmp.eq.s32.totalorder %s26, 1
      %p227 = por %p225, %p226
      %p229 = scmp.ne.s32.totalorder %s214, %s228
      %p230 = scmp.eq.s32.totalorder %s26, 0
      %p231 = por %p229, %p230
      %s232 = ssub.s32 %s20, %s27
      %p233 = scmp.eq.s32.totalorder %s232, 0
      %s235 = sadd.s32 %s234, 1
      %s236 = scalar_select %p233, %s234, %s235
      %p239 = pneg %p233
      %p240 = scmp.eq.s32.totalorder %s20, 1
      %p241 = por %p239, %p240
      %p242 = scmp.ne.s32.totalorder %s234, %s237
      %p243 = scmp.eq.s32.totalorder %s20, 0
      %p244 = por %p242, %p243
      %p245 = scmp.ne.s32.totalorder %s234, %s237
      %p246 = scmp.eq.s32.totalorder %s25, 1
      %p247 = por %p245, %p246
      %p248 = scmp.ne.s32.totalorder %s237, %s238
      %p249 = scmp.eq.s32.totalorder %s25, 0
      %p250 = por %p248, %p249
      %p251 = scmp.ne.s32.totalorder %s237, %s238
      %p252 = scmp.eq.s32.totalorder %s26, 1
      %p253 = por %p251, %p252
      %p255 = scmp.ne.s32.totalorder %s238, %s254
      %p256 = scmp.eq.s32.totalorder %s26, 0
      %p257 = por %p255, %p256
      %s258 = ssub.s32 %s20, %s27
      %p259 = scmp.eq.s32.totalorder %s258, 0
      %s261 = sadd.s32 %s260, 1
      %s262 = scalar_select %p259, %s260, %s261
      %p265 = pneg %p259
      %p266 = scmp.eq.s32.totalorder %s20, 1
      %p267 = por %p265, %p266
      %p268 = scmp.ne.s32.totalorder %s260, %s263
      %p269 = scmp.eq.s32.totalorder %s20, 0
      %p270 = por %p268, %p269
      %p271 = scmp.ne.s32.totalorder %s260, %s263
      %p272 = scmp.eq.s32.totalorder %s25, 1
      %p273 = por %p271, %p272
      %p274 = scmp.ne.s32.totalorder %s263, %s264
      %p275 = scmp.eq.s32.totalorder %s25, 0
      %p276 = por %p274, %p275
      %p277 = scmp.ne.s32.totalorder %s263, %s264
      %p278 = scmp.eq.s32.totalorder %s26, 1
      %p279 = por %p277, %p278
      %p281 = scmp.ne.s32.totalorder %s264, %s280
      %p282 = scmp.eq.s32.totalorder %s26, 0
      %p283 = por %p281, %p282
      %p284 = scmp.le.s32.totalorder 1, %s20
      %p285 = scmp.lt.s32.totalorder %s20, 3
      %p286 = pnand %p284, %p285
      %p287 = pneg %p286
      // Predicated region
      $region9: #{tpu_custom_call.1} parent=5 // pred_check
        _
      $region10: #{tpu_custom_call.1} parent=5 // pred_check_branch
        %289 = sbr.rel (%p286) target = $region12
      $region11: #{tpu_custom_call.1} parent=5 // pred_region
        %s290 = ssub.s32 %s20, 1
        // Predicated region
        $region13: #{tpu_custom_call.1} parent=11 // pred_check
          %p291 = pneg %p93
        $region14: #{tpu_custom_call.1} parent=11 // pred_check_branch
          %293 = sbr.rel (%p291) target = $region16
        $region15: #{tpu_custom_call.1} parent=11 // pred_region
          _
        $region16: #{tpu_custom_call.1} parent=11 // pred_fallthru
          _
        // Predicated region
        $region17: #{tpu_custom_call.1} parent=11 // pred_check
          %p294 = pneg %p114
        $region18: #{tpu_custom_call.1} parent=11 // pred_check_branch
          %296 = sbr.rel (%p294) target = $region20
        $region19: #{tpu_custom_call.1} parent=11 // pred_region
          _
        $region20: #{tpu_custom_call.1} parent=11 // pred_fallthru
          _
        // Predicated region
        $region21: #{tpu_custom_call.1} parent=11 // pred_check
          %p297 = pneg %p135
        $region22: #{tpu_custom_call.1} parent=11 // pred_check_branch
          %299 = sbr.rel (%p297) target = $region24
        $region23: #{tpu_custom_call.1} parent=11 // pred_region
          _
        $region24: #{tpu_custom_call.1} parent=11 // pred_fallthru
          _
        // Predicated region
        $region25: #{tpu_custom_call.1} parent=11 // pred_check
          %p300 = pneg %p156
        $region26: #{tpu_custom_call.1} parent=11 // pred_check_branch
          %302 = sbr.rel (%p300) target = $region28
        $region27: #{tpu_custom_call.1} parent=11 // pred_region
          _
        $region28: #{tpu_custom_call.1} parent=11 // pred_fallthru
          _
        // Predicated region
        $region29: #{tpu_custom_call.1} parent=11 // pred_check
          %p303 = pneg %p203
        $region30: #{tpu_custom_call.1} parent=11 // pred_check_branch
          %305 = sbr.rel (%p303) target = $region32
        $region31: #{tpu_custom_call.1} parent=11 // pred_region
          _
        $region32: #{tpu_custom_call.1} parent=11 // pred_fallthru
          _
        // Predicated region
        $region33: #{tpu_custom_call.1} parent=11 // pred_check
          %p306 = pneg %p224
        $region34: #{tpu_custom_call.1} parent=11 // pred_check_branch
          %308 = sbr.rel (%p306) target = $region36
        $region35: #{tpu_custom_call.1} parent=11 // pred_region
          _
        $region36: #{tpu_custom_call.1} parent=11 // pred_fallthru
          _
      $region12: #{tpu_custom_call.1} parent=5 // pred_fallthru
        _
      %p309 = scmp.lt.s32.totalorder %s20, 2
      // Predicated region
      $region37: #{tpu_custom_call.1} parent=5 // pred_check
        %p310 = pneg %p309
      $region38: #{tpu_custom_call.1} parent=5 // pred_check_branch
        %312 = sbr.rel (%p310) target = $region40
      $region39: #{tpu_custom_call.1} parent=5 // pred_region
        // Predicated region
        $region41: #{tpu_custom_call.1} parent=39 // pred_check
          %p313 = pneg %p40
        $region42: #{tpu_custom_call.1} parent=39 // pred_check_branch
          %315 = sbr.rel (%p313) target = $region44
        $region43: #{tpu_custom_call.1} parent=39 // pred_region
          %p316 = scmp.lt.s32.totalorder %s20, 1
          %s317 = scalar_select %p316, %s20, 1
          %s318 = smul.addr %s317, 8
          %s319 = scalar_lea.vmem %s0, %s318
        $region44: #{tpu_custom_call.1} parent=39 // pred_fallthru
          _
        // Predicated region
        $region45: #{tpu_custom_call.1} parent=39 // pred_check
          %p320 = pneg %p66
        $region46: #{tpu_custom_call.1} parent=39 // pred_check_branch
          %322 = sbr.rel (%p320) target = $region48
        $region47: #{tpu_custom_call.1} parent=39 // pred_region
          %p323 = scmp.lt.s32.totalorder %s20, 1
          %s324 = scalar_select %p323, %s20, 1
          %s325 = smul.addr %s324, 8
          %s326 = scalar_lea.vmem %s1, %s325
        $region48: #{tpu_custom_call.1} parent=39 // pred_fallthru
          _
        // Predicated region
        $region49: #{tpu_custom_call.1} parent=39 // pred_check
          %p327 = pneg %p176
        $region50: #{tpu_custom_call.1} parent=39 // pred_check_branch
          %329 = sbr.rel (%p327) target = $region52
        $region51: #{tpu_custom_call.1} parent=39 // pred_region
          %p330 = scmp.lt.s32.totalorder %s20, 1
          %s331 = scalar_select %p330, %s20, 1
          %s332 = smul.addr %s331, 8
          %s333 = scalar_lea.vmem %s6, %s332
        $region52: #{tpu_custom_call.1} parent=39 // pred_fallthru
          _
      $region40: #{tpu_custom_call.1} parent=5 // pred_fallthru
        _
      %p334 = scmp.le.s32.totalorder 1, %s20
      %p335 = scmp.lt.s32.totalorder %s20, 3
      %p336 = pnand %p334, %p335
      %p337 = pneg %p336
      // Predicated region
      $region53: #{tpu_custom_call.1} parent=5 // pred_check
        _
      $region54: #{tpu_custom_call.1} parent=5 // pred_check_branch
        %339 = sbr.rel (%p336) target = $region56
      $region55: #{tpu_custom_call.1} parent=5 // pred_region
        %s340 = ssub.s32 %s20, 1
        %p341 = scmp.lt.s32.totalorder %s25, 1
        %s342 = scalar_select %p341, %s25, 1
        %s343 = smul.addr %s342, 8
        %s344 = scalar_lea.vmem %s0, %s343
        %p345 = pneg %p46
        %p346 = pneg %p43
        %p347 = scmp.lt.s32.totalorder %s25, 1
        %s348 = scalar_select %p347, %s25, 1
        %s349 = smul.addr %s348, 8
        %s350 = scalar_lea.vmem %s1, %s349
        %p351 = pneg %p72
        %p352 = pneg %p69
        %p353 = pneg %p93
        %p354 = pneg %p90
        %p355 = pneg %p114
        %p356 = pneg %p111
        %p357 = pneg %p135
        %p358 = pneg %p132
        %p359 = pneg %p156
        %p360 = pneg %p153
        %p361 = scmp.lt.s32.totalorder %s25, 1
        %s362 = scalar_select %p361, %s25, 1
        %s363 = smul.addr %s362, 8
        %s364 = scalar_lea.vmem %s6, %s363
        %p365 = pneg %p182
        %p366 = pneg %p179
        %p367 = pneg %p203
        %p368 = pneg %p200
        %p369 = pneg %p224
        %p370 = pneg %p221
        %p371 = pneg %p250
        %p372 = pneg %p247
        %s373 = sand.u32 %s237, 1
        %s374 = scalar_lea.sflag [#allocation3], %s373
        %s375 = sand.u32 %s237, 1
        %s376 = smul.addr %s375, 8
        %s377 = scalar_lea.vmem [#allocation2], %s376
        %p378 = pneg %p276
        %p379 = pneg %p273
        %p380 = scmp.lt.s32.totalorder %s25, 1
        %s381 = scalar_select %p380, %s25, 1
        %s382 = smul.addr %s381, 8
        %s383 = scalar_lea.vmem %s10, %s382
        %p384 = scmp.lt.s32.totalorder %s25, 1
        %s385 = scalar_select %p384, %s25, 1
        %s386 = smul.addr %s385, 8
        %s387 = scalar_lea.vmem %s0, %s386
        %p388 = scmp.lt.s32.totalorder %s25, 1
        %s389 = scalar_select %p388, %s25, 1
        %s390 = smul.addr %s389, 8
        %s391 = scalar_lea.vmem %s1, %s390
        %p392 = scmp.lt.s32.totalorder %s25, 1
        %s393 = scalar_select %p392, %s25, 1
        %s394 = smul.addr %s393, 8
        %s395 = scalar_lea.vmem %s6, %s394
        %p396 = scmp.lt.s32.totalorder %s25, 1
        %s397 = scalar_select %p396, %s25, 1
        %s398 = smul.addr %s397, 8
        %s399 = scalar_lea.vmem %s10, %s398
        %v400 = vld [vmem:[%s387] sm:$0xff]
        %v401 = vld [vmem:[%s2] sm:$0xff]
        %v402 = vld [vmem:[%s2 + $0x8] sm:$0xff]
        %v403 = vld [vmem:[%s2 + $0x10] sm:$0xff]
        %v404 = vld [vmem:[%s4] sm:$0x1]
        %v406 = vperm.slane %v404, 0
        %vm408 = vcmask 195584
        %v410 = vsel %vm408, %v400, 0
        %412 = vmatpush.msra.mxu0 0.0
        %413 = vmatpush.msra.mxu0 0.0
        %414 = vmatpush.msra.mxu0 0.0
        %415 = vmatpush.msra.mxu0 0.0
        %416 = vmatpush.msra.mxu0 0.0
        %417 = vmatpush.msra.mxu0 0.0
        %418 = vmatpush.msra.mxu0 0.0
        %419 = vmatpush.msra.mxu0 0.0
        %420 = vmatpush.msra.mxu0 0.0
        %421 = vmatpush.msra.mxu0 0.0
        %422 = vmatpush.msra.mxu0 0.0
        %423 = vmatpush.msra.mxu0 0.0
        %424 = vmatpush.msra.mxu0 0.0
        %425 = vmatpush.msra.mxu0 %v403
        %426 = vmatpush.msra.mxu0 %v402
        %427 = vmatpush.msra.mxu0 %v401
        %428 = vmatmul.f32.gmra.mxu0 %v410
        %v429 = vpop.f32.mrf.mxu0
        %v430 = vadd.f32 %v406, %v429
        %431 = vdwg.mxu0
        %v432 = vmax.f32 %v430, 0.0
        %v433 = vld [vmem:[%s395] sm:$0xff]
        %435 = vset.pattern.permute.xlu0 0
        %436 = vperm.xlu0 %435, %v433
        %v437 = vpop.permute.xlu0 %436
        %v439 = vmul.f32 %v432, %v437
        %v440 = vld [vmem:[%s391] sm:$0xff]
        %v441 = vld [vmem:[%s3] sm:$0xff]
        %v442 = vld [vmem:[%s3 + $0x8] sm:$0xff]
        %v443 = vld [vmem:[%s3 + $0x10] sm:$0xff]
        %v444 = vld [vmem:[%s3 + $0x18] sm:$0xff]
        %v445 = vld [vmem:[%s5] sm:$0x1]
        %v447 = vperm.slane %v445, 0
        %vm449 = vcmask 261120
        %v451 = vsel %vm449, %v440, 0
        %453 = vmatpush.msra.mxu0 0.0
        %454 = vmatpush.msra.mxu0 0.0
        %455 = vmatpush.msra.mxu0 0.0
        %456 = vmatpush.msra.mxu0 0.0
        %457 = vmatpush.msra.mxu0 0.0
        %458 = vmatpush.msra.mxu0 0.0
        %459 = vmatpush.msra.mxu0 0.0
        %460 = vmatpush.msra.mxu0 0.0
        %461 = vmatpush.msra.mxu0 0.0
        %462 = vmatpush.msra.mxu0 0.0
        %463 = vmatpush.msra.mxu0 0.0
        %464 = vmatpush.msra.mxu0 0.0
        %465 = vmatpush.msra.mxu0 %v444
        %466 = vmatpush.msra.mxu0 %v443
        %467 = vmatpush.msra.mxu0 %v442
        %468 = vmatpush.msra.mxu0 %v441
        %469 = vmatmul.f32.gmra.mxu0 %v451
        %v470 = vpop.f32.mrf.mxu0
        %v471 = vadd.f32 %v447, %v470
        %472 = vdwg.mxu0
        %v473 = vmax.f32 %v471, 0.0
        %474 = vset.pattern.permute.xlu0 1
        %475 = vperm.xlu0 %474, %v433
        %v476 = vpop.permute.xlu0 %475
        %v478 = vmul.f32 %v473, %v476
        %v479 = vadd.f32 %v439, %v478
        %480 = vrot.lane.b32.xlu0 %v433, 127
        %v481 = vpop.permute.xlu0 %480
        %v483 = vadd.f32 %v433, %v481
        %v484 = vmax.f32 %v483, 1.0
        %486 = vset.pattern.permute.xlu0 0
        %487 = vperm.xlu0 %486, %v484
        %v488 = vpop.permute.xlu0 %487
        %v490 = vrcp.pop %v488
        %v491 = vmul.f32 %v488, %v490
        %v492 = vsub.f32 1.0, %v491
        %v493 = vmul.f32 %v490, %v492
        %v494 = vadd.f32 %v490, %v493
        %vm495 = vweird.f32 %v488
        %vm496 = vweird.f32 %v490
        %vm497 = vmor %vm495, %vm496
        %v498 = vsel %vm497, %v490, %v494
        %v499 = vand.u32 2147483647, %v488
        %vm500 = vcmp.eq.f32.partialorder %v499, 8.507059e+37
        %v501 = vand.u32 %v488, 2147483648
        %v502 = vor.u32 1.1754944e-38, %v501
        %v503 = vsel %vm500, %v502, %v498
        %v504 = vmul.f32 %v479, %v503
        %505 = vst [vmem:[%s377] sm:$0xff] %v504
        %v506 = vld [vmem:[%s7] sm:$0xff]
        %v507 = vld [vmem:[%s7 + $0x8] sm:$0xff]
        %v508 = vld [vmem:[%s7 + $0x10] sm:$0xff]
        %v509 = vld [vmem:[%s7 + $0x18] sm:$0xff]
        %v510 = vld [vmem:[%s7 + $0x20] sm:$0xff]
        %v511 = vld [vmem:[%s7 + $0x28] sm:$0xff]
        %v512 = vld [vmem:[%s7 + $0x30] sm:$0xff]
        %v513 = vld [vmem:[%s7 + $0x38] sm:$0xff]
        %v514 = vld [vmem:[%s7 + $0x40] sm:$0xff]
        %v515 = vld [vmem:[%s7 + $0x48] sm:$0xff]
        %v516 = vld [vmem:[%s7 + $0x50] sm:$0xff]
        %v517 = vld [vmem:[%s7 + $0x58] sm:$0xff]
        %v518 = vld [vmem:[%s7 + $0x60] sm:$0xff]
        %v519 = vld [vmem:[%s7 + $0x68] sm:$0xff]
        %v520 = vld [vmem:[%s7 + $0x70] sm:$0xff]
        %v521 = vld [vmem:[%s7 + $0x78] sm:$0xff]
        %v522 = vld [vmem:[%s8] sm:$0x1]
        %v524 = vperm.slane %v522, 0
        %526 = vmatpush.msra.mxu0 %v521
        %527 = vmatpush.msra.mxu0 %v520
        %528 = vmatpush.msra.mxu0 %v519
        %529 = vmatpush.msra.mxu0 %v518
        %530 = vmatpush.msra.mxu0 %v517
        %531 = vmatpush.msra.mxu0 %v516
        %532 = vmatpush.msra.mxu0 %v515
        %533 = vmatpush.msra.mxu0 %v514
        %534 = vmatpush.msra.mxu0 %v513
        %535 = vmatpush.msra.mxu0 %v512
        %536 = vmatpush.msra.mxu0 %v511
        %537 = vmatpush.msra.mxu0 %v510
        %538 = vmatpush.msra.mxu0 %v509
        %539 = vmatpush.msra.mxu0 %v508
        %540 = vmatpush.msra.mxu0 %v507
        %541 = vmatpush.msra.mxu0 %v506
        %542 = vmatmul.f32.gmra.mxu0 %v504
        %v543 = vpop.f32.mrf.mxu0
        %v544 = vadd.f32 %v524, %v543
        %545 = vdwg.mxu0
        %vm546 = vcmask 64512
        %547 = vst.msk [vmem:[%s399] sm:$0xff] %vm546, %v544
        %s548 = sand.u32 %s237, 1
        %s549 = scalar_lea.sflag [#allocation3], %s548
        %s550 = sand.u32 %s237, 1
        %s551 = smul.addr %s550, 8
        %s552 = scalar_lea.vmem [#allocation2], %s551
        %p553 = scmp.lt.s32.totalorder %s25, 1
        %s554 = scalar_select %p553, %s25, 1
        %s555 = smul.addr %s554, 8
        %s556 = scalar_lea.vmem %s10, %s555
        // Predicated region
        $region57: #{tpu_custom_call.1} parent=55 // pred_check
          %p557 = pneg %p247
        $region58: #{tpu_custom_call.1} parent=55 // pred_check_branch
          %559 = sbr.rel (%p557) target = $region60
        $region59: #{tpu_custom_call.1} parent=55 // pred_region
          %561 = vsyncadd %s549, 0
          %s562 = smul.addr %s25, 8
          %s563 = scalar_lea.hbm %s9, %s562
          %s565 = sshll.u32 %s552, 4
          %s566 = int_to_ptr.vmem [resolvable:$true] %s565
          %s567 = sshll.u32 %s563, 4
          %s568 = int_to_ptr.hbm [resolvable:$true] %s567
          %570 = dma.vmem_to_hbm [thread:$0]  %s566, 128, %s568, %s549
        $region60: #{tpu_custom_call.1} parent=55 // pred_fallthru
          _
        // Predicated region
        $region61: #{tpu_custom_call.1} parent=55 // pred_check
          %p571 = pneg %p273
        $region62: #{tpu_custom_call.1} parent=55 // pred_check_branch
          %573 = sbr.rel (%p571) target = $region64
        $region63: #{tpu_custom_call.1} parent=55 // pred_region
          _
        $region64: #{tpu_custom_call.1} parent=55 // pred_fallthru
          _
      $region56: #{tpu_custom_call.1} parent=5 // pred_fallthru
        _
      %p574 = scmp.le.s32.totalorder 2, %s20
      // Predicated region
      $region65: #{tpu_custom_call.1} parent=5 // pred_check
        %p575 = pneg %p574
      $region66: #{tpu_custom_call.1} parent=5 // pred_check_branch
        %577 = sbr.rel (%p575) target = $region68
      $region67: #{tpu_custom_call.1} parent=5 // pred_region
        %s578 = ssub.s32 %s20, 2
        // Predicated region
        $region69: #{tpu_custom_call.1} parent=67 // pred_check
          %p579 = pneg %p253
        $region70: #{tpu_custom_call.1} parent=67 // pred_check_branch
          %581 = sbr.rel (%p579) target = $region72
        $region71: #{tpu_custom_call.1} parent=67 // pred_region
          %s582 = sand.u32 %s238, 1
          %s583 = scalar_lea.sflag [#allocation3], %s582
          %s584 = sand.u32 %s238, 1
          %s585 = smul.addr %s584, 8
          %s586 = scalar_lea.vmem [#allocation2], %s585
          %588 = dma.done %s583, 128
        $region72: #{tpu_custom_call.1} parent=67 // pred_fallthru
          _
        // Predicated region
        $region73: #{tpu_custom_call.1} parent=67 // pred_check
          %p589 = pneg %p279
        $region74: #{tpu_custom_call.1} parent=67 // pred_check_branch
          %591 = sbr.rel (%p589) target = $region76
        $region75: #{tpu_custom_call.1} parent=67 // pred_region
          %p592 = scmp.lt.s32.totalorder %s26, 1
          %s593 = scalar_select %p592, %s26, 1
          %s594 = smul.addr %s593, 8
          %s595 = scalar_lea.vmem %s10, %s594
        $region76: #{tpu_custom_call.1} parent=67 // pred_fallthru
          _
      $region68: #{tpu_custom_call.1} parent=5 // pred_fallthru
        _
    $region6: #{tpu_custom_call.1} parent=1 // loop_footer
      %s24 = sadd.s32 1, %s20
    $region7: #{tpu_custom_call.1} parent=1 // loop_footer_branch
      %19 = sbr.rel target = $region3
    $region8: #{tpu_custom_call.1} parent=1 // loop_exit
      _
    %596 = vsyncpa [#allocation3], 1
    %s597 = scalar_lea.sflag [#allocation3], 1
    %598 = vsyncpa %s597, 1

</llo_original>
